<compile_context>
chip_gen: v7x
topology: tpu7x:2x2x1
jax: 0.10.0
libtpu: 0.0.40
codegen_flags: <defaults>
</compile_context>

<pallas_src>
import math

import jax
import jax.numpy as jnp
from jax.experimental import pallas as pl
from jax.experimental.pallas import tpu as pltpu

IN_FEATURES = 32
OUT_FEATURES = 4
HEADS = 8
HIDDEN = OUT_FEATURES * HEADS      # out_features * 8 = 32
KQV = 3 * HIDDEN                   # 96
INV_SQRT_H = 1.0 / math.sqrt(HEADS)

LANE = 128                         # TPU lane width
MAX_TILE_B = 1024                  # batch lanes per grid step (review: 512-2048)


def ultimus_kernel(xt_ref, wkqvt_ref, bkqvt_ref, wot_ref, bot_ref, outt_ref):
    """Fused UltimusBlock forward for one batch tile, batch on the lane axis.

    xt_ref:    (F, TB)      x transposed (features on sublanes, batch on lanes)
    wkqvt_ref: (KQV, F)     rows = [Wk^T | Wq^T | Wv^T] (torch head-major cols)
    bkqvt_ref: (KQV, 1)
    wot_ref:   (O, HIDDEN)  output projection, pre-scaled by 1/sqrt(8)
    bot_ref:   (O, 1)
    outt_ref:  (O, TB)      transposed output -> lane-dense stores
    """
    xt = xt_ref[...]                                        # (F, TB)
    O = OUT_FEATURES

    # One fused MXU matmul for the K, Q and V projections (batch on lanes).
    kqvt = (jnp.dot(wkqvt_ref[...], xt, preferred_element_type=jnp.float32)
            + bkqvt_ref[...])                               # (96, TB)

    # Tile-aligned row splits (multiples of 8 sublanes -> no relayout).
    kt = kqvt[0:HIDDEN]                                     # row h*4+j = k[:, h, j]
    qt = kqvt[HIDDEN:2 * HIDDEN]                            # row h*4+i = q[:, h, i]
    vt = kqvt[2 * HIDDEN:KQV]                               # row h*4+i = v[:, h, i]

    # s3[i, j, b] = sum_h q[b, h, i] * k[b, h, j]   (torch: bmm(q^T, k))
    # 8-term unrolled multiply-add chain; every operand is full 128-lane wide.
    s3 = qt[0:O][:, None, :] * kt[0:O][None, :, :]          # head 0, (4, 4, TB)
    for h in range(1, HEADS):
        qh = qt[h * O:(h + 1) * O]                          # (4, TB), row = i
        kh = kt[h * O:(h + 1) * O]                          # (4, TB), row = j
        s3 = s3 + qh[:, None, :] * kh[None, :, :]

    # softmax over i (torch dim=1) == leading axis here, so the max/sum
    # reductions are plain elementwise ops across 4 slabs (no cross-lane XLU).
    m = jnp.max(s3, axis=0, keepdims=True)                  # (1, 4, TB)
    e = jnp.exp(s3 - m)                                     # EUP
    denom = jnp.sum(e, axis=0, keepdims=True)               # (1, 4, TB)
    # 1/sqrt(8) is folded into wot; approx=False keeps the 1e-4 check tight
    # (use approx=True to push the reciprocal onto the EUP slot).
    am3 = e * pl.reciprocal(denom, approx=False)            # (4, 4, TB)

    # z[b, h, j] = sum_i v[b, h, i] * am[b, i, j]  -- 4-term chain per head.
    z_heads = []
    for h in range(HEADS):
        vh = vt[h * O:(h + 1) * O]                          # (4, TB), row = i
        z_heads.append(jnp.sum(vh[:, None, :] * am3, axis=0))   # (4, TB), row = j
    zt = jnp.concatenate(z_heads, axis=0)                   # (32, TB) head-major flatten

    # Output projection on the MXU; result stays batch-on-lanes so the final
    # store is a full-width (lane dense) vst.
    outt = (jnp.dot(wot_ref[...], zt, preferred_element_type=jnp.float32)
            + bot_ref[...])                                 # (O, TB)
    outt_ref[...] = outt.astype(outt_ref.dtype)


def prepare_params(params):
    """Fuse/transpose the weights once, outside the kernel (cached per model)."""
    wk, bk, wq, bq, wv, bv, wo, bo = params
    wkqvt = jnp.concatenate([wk.T, wq.T, wv.T], axis=0)     # (96, 32)
    bkqvt = jnp.concatenate(
        [bk.reshape(-1), bq.reshape(-1), bv.reshape(-1)]).reshape(KQV, 1)
    wot = (wo * INV_SQRT_H).T                               # (4, 32), scale folded in
    bot = bo.reshape(OUT_FEATURES, 1)                       # (4, 1)
    return (wkqvt, bkqvt, wot, bot)


def _round_up(n, m):
    return ((n + m - 1) // m) * m


def ultimus_forward(x, fused_params):
    """Runs the fused UltimusBlock kernel.  x: (B, IN_FEATURES) f32 -> (B, 4)."""
    wkqvt, bkqvt, wot, bot = fused_params
    B, F = x.shape
    O = OUT_FEATURES

    # Lane-dense batch tiles, padded to a tile multiple; prefer >=2 grid steps
    # (v7x megacore) whenever the padded batch allows it.
    bp = _round_up(B, LANE)
    tb = min(MAX_TILE_B, max(LANE, (bp // 2) // LANE * LANE))
    bp = _round_up(bp, tb)
    grid = (bp // tb,)

    # Layout plumbing only: batch onto the lane axis, zero-pad to tile multiple.
    xt = x.T                                                # (F, B)
    if bp != B:
        xt = jnp.pad(xt, ((0, 0), (0, bp - B)))             # padded lanes stay finite

    cost = pl.CostEstimate(
        flops=2 * bp * (F * KQV + 2 * HEADS * O * O + HIDDEN * O),
        transcendentals=bp * O * O,
        bytes_accessed=4 * (bp * (F + O) + KQV * (F + 1) + O * (HIDDEN + 1)),
    )

    outt = pl.pallas_call(
        ultimus_kernel,
        out_shape=jax.ShapeDtypeStruct((O, bp), jnp.float32),
        grid=grid,
        in_specs=[
            pl.BlockSpec((F, tb), lambda i: (0, i)),        # x^T, blocked on batch lanes
            pl.BlockSpec((KQV, F), lambda i: (0, 0)),       # fused KQV weight (resident)
            pl.BlockSpec((KQV, 1), lambda i: (0, 0)),
            pl.BlockSpec((O, HIDDEN), lambda i: (0, 0)),
            pl.BlockSpec((O, 1), lambda i: (0, 0)),
        ],
        out_specs=pl.BlockSpec((O, tb), lambda i: (0, i)),  # lane-dense output block
        compiler_params=pltpu.CompilerParams(
            dimension_semantics=("parallel",)),
        cost_estimate=cost,
    )(xt, wkqvt, bkqvt, wot, bot)

    return outt[:, :B].T                                    # back to (B, O)


def ref_forward(x, params):
    """Pure-JAX reference mirroring the PyTorch module exactly."""
    wk, bk, wq, bq, wv, bv, wo, bo = params
    B = x.shape[0]
    k = (x @ wk + bk).reshape(B, HEADS, -1)
    q = (x @ wq + bq).reshape(B, HEADS, -1)
    v = (x @ wv + bv).reshape(B, HEADS, -1)
    s = jnp.einsum('bhi,bhj->bij', q, k)                    # bmm(q.transpose(1,2), k)
    am = jax.nn.softmax(s, axis=1) / math.sqrt(HEADS)       # softmax over dim=1
    z = jnp.einsum('bhi,bij->bhj', v, am).reshape(B, -1)
    return z @ wo + bo


def make_params(key):
    """Deterministic init matching nn.Linear shapes (weights stored transposed)."""
    ks = jax.random.split(key, 8)
    b1 = 1.0 / math.sqrt(IN_FEATURES)
    b2 = 1.0 / math.sqrt(HIDDEN)
    wk = jax.random.uniform(ks[0], (IN_FEATURES, HIDDEN), jnp.float32, -b1, b1)
    bk = jax.random.uniform(ks[1], (1, HIDDEN), jnp.float32, -b1, b1)
    wq = jax.random.uniform(ks[2], (IN_FEATURES, HIDDEN), jnp.float32, -b1, b1)
    bq = jax.random.uniform(ks[3], (1, HIDDEN), jnp.float32, -b1, b1)
    wv = jax.random.uniform(ks[4], (IN_FEATURES, HIDDEN), jnp.float32, -b1, b1)
    bv = jax.random.uniform(ks[5], (1, HIDDEN), jnp.float32, -b1, b1)
    wo = jax.random.uniform(ks[6], (HIDDEN, OUT_FEATURES), jnp.float32, -b2, b2)
    bo = jax.random.uniform(ks[7], (1, OUT_FEATURES), jnp.float32, -b2, b2)
    return (wk, bk, wq, bq, wv, bv, wo, bo)


if __name__ == "__main__":
    key = jax.random.PRNGKey(0)
    pkey, xkey = jax.random.split(key)
    params = make_params(pkey)
    fused = prepare_params(params)   # done once, not per forward call

    B = 2
    x = jax.random.normal(xkey, (B, IN_FEATURES), jnp.float32)

    out = jax.block_until_ready(ultimus_forward(x, fused))

    ref = ref_forward(x, params)
    assert out.shape == (B, OUT_FEATURES)
    assert jnp.allclose(out, ref, atol=1e-4, rtol=1e-4), (out, ref)
    print("KERNEL_OK")
</pallas_src>

<mosaic_0001>
module attributes {stable_mosaic.version = 11 : i64} {
  func.func @ultimus_kernel(%arg0: i32, %arg1: memref<32x128xf32, #tpu.memory_space<vmem>>, %arg2: memref<96x32xf32, #tpu.memory_space<vmem>>, %arg3: memref<96x1xf32, #tpu.memory_space<vmem>>, %arg4: memref<4x32xf32, #tpu.memory_space<vmem>>, %arg5: memref<4x1xf32, #tpu.memory_space<vmem>>, %arg6: memref<4x128xf32, #tpu.memory_space<vmem>>) attributes {dimension_semantics = [#tpu.dimension_semantics<parallel>], iteration_bounds = array<i64: 1>, scalar_prefetch = 0 : i64, scratch_operands = 0 : i64, tpu.core_type = #tpu.core_type<tc>, window_params = [{transform_indices = @transform_0, window_bounds = array<i64: 32, 128>}, {pipeline_mode = #tpu.pipeline_mode<synchronous>, transform_indices = @transform_1, window_bounds = array<i64: 96, 32>}, {pipeline_mode = #tpu.pipeline_mode<synchronous>, transform_indices = @transform_2, window_bounds = array<i64: 96, 1>}, {pipeline_mode = #tpu.pipeline_mode<synchronous>, transform_indices = @transform_3, window_bounds = array<i64: 4, 32>}, {pipeline_mode = #tpu.pipeline_mode<synchronous>, transform_indices = @transform_4, window_bounds = array<i64: 4, 1>}, {transform_indices = @transform_5, window_bounds = array<i64: 4, 128>}]} {
    %c0 = arith.constant 0 : index
    %c0_0 = arith.constant 0 : index
    %0 = vector.load %arg1[%c0, %c0_0] : memref<32x128xf32, #tpu.memory_space<vmem>>, vector<32x128xf32>
    %c0_1 = arith.constant 0 : index
    %c0_2 = arith.constant 0 : index
    %1 = vector.load %arg2[%c0_1, %c0_2] : memref<96x32xf32, #tpu.memory_space<vmem>>, vector<96x32xf32>
    %cst = arith.constant dense<0.000000e+00> : vector<96x128xf32>
    %2 = tpu.matmul %1, %0, %cst {dimension_numbers = #tpu.dot_dimension_numbers<[1], [0], [0], [1], [0, 0, 1, 1], [], []>} : vector<96x32xf32>, vector<32x128xf32>, vector<96x128xf32> -> vector<96x128xf32>
    %c0_3 = arith.constant 0 : index
    %c0_4 = arith.constant 0 : index
    %3 = vector.load %arg3[%c0_3, %c0_4] : memref<96x1xf32, #tpu.memory_space<vmem>>, vector<96x1xf32>
    %4 = vector.broadcast %3 : vector<96x1xf32> to vector<96x128xf32>
    %5 = arith.addf %2, %4 : vector<96x128xf32>
    %6 = vector.extract_strided_slice %5 {offsets = [0, 0], sizes = [32, 128], strides = [1, 1]} : vector<96x128xf32> to vector<32x128xf32>
    %7 = vector.extract_strided_slice %5 {offsets = [32, 0], sizes = [32, 128], strides = [1, 1]} : vector<96x128xf32> to vector<32x128xf32>
    %8 = vector.extract_strided_slice %5 {offsets = [64, 0], sizes = [32, 128], strides = [1, 1]} : vector<96x128xf32> to vector<32x128xf32>
    %9 = vector.extract_strided_slice %7 {offsets = [0, 0], sizes = [4, 128], strides = [1, 1]} : vector<32x128xf32> to vector<4x128xf32>
    %10 = vector.shape_cast %9 : vector<4x128xf32> to vector<4x1x128xf32>
    %11 = vector.extract_strided_slice %6 {offsets = [0, 0], sizes = [4, 128], strides = [1, 1]} : vector<32x128xf32> to vector<4x128xf32>
    %12 = vector.shape_cast %11 : vector<4x128xf32> to vector<1x4x128xf32>
    %13 = vector.broadcast %10 : vector<4x1x128xf32> to vector<4x4x128xf32>
    %14 = vector.broadcast %12 : vector<1x4x128xf32> to vector<4x4x128xf32>
    %15 = arith.mulf %13, %14 : vector<4x4x128xf32>
    %16 = vector.extract_strided_slice %7 {offsets = [4, 0], sizes = [4, 128], strides = [1, 1]} : vector<32x128xf32> to vector<4x128xf32>
    %17 = vector.extract_strided_slice %6 {offsets = [4, 0], sizes = [4, 128], strides = [1, 1]} : vector<32x128xf32> to vector<4x128xf32>
    %18 = vector.shape_cast %16 : vector<4x128xf32> to vector<4x1x128xf32>
    %19 = vector.shape_cast %17 : vector<4x128xf32> to vector<1x4x128xf32>
    %20 = vector.broadcast %18 : vector<4x1x128xf32> to vector<4x4x128xf32>
    %21 = vector.broadcast %19 : vector<1x4x128xf32> to vector<4x4x128xf32>
    %22 = arith.mulf %20, %21 : vector<4x4x128xf32>
    %23 = arith.addf %15, %22 : vector<4x4x128xf32>
    %24 = vector.extract_strided_slice %7 {offsets = [8, 0], sizes = [4, 128], strides = [1, 1]} : vector<32x128xf32> to vector<4x128xf32>
    %25 = vector.extract_strided_slice %6 {offsets = [8, 0], sizes = [4, 128], strides = [1, 1]} : vector<32x128xf32> to vector<4x128xf32>
    %26 = vector.shape_cast %24 : vector<4x128xf32> to vector<4x1x128xf32>
    %27 = vector.shape_cast %25 : vector<4x128xf32> to vector<1x4x128xf32>
    %28 = vector.broadcast %26 : vector<4x1x128xf32> to vector<4x4x128xf32>
    %29 = vector.broadcast %27 : vector<1x4x128xf32> to vector<4x4x128xf32>
    %30 = arith.mulf %28, %29 : vector<4x4x128xf32>
    %31 = arith.addf %23, %30 : vector<4x4x128xf32>
    %32 = vector.extract_strided_slice %7 {offsets = [12, 0], sizes = [4, 128], strides = [1, 1]} : vector<32x128xf32> to vector<4x128xf32>
    %33 = vector.extract_strided_slice %6 {offsets = [12, 0], sizes = [4, 128], strides = [1, 1]} : vector<32x128xf32> to vector<4x128xf32>
    %34 = vector.shape_cast %32 : vector<4x128xf32> to vector<4x1x128xf32>
    %35 = vector.shape_cast %33 : vector<4x128xf32> to vector<1x4x128xf32>
    %36 = vector.broadcast %34 : vector<4x1x128xf32> to vector<4x4x128xf32>
    %37 = vector.broadcast %35 : vector<1x4x128xf32> to vector<4x4x128xf32>
    %38 = arith.mulf %36, %37 : vector<4x4x128xf32>
    %39 = arith.addf %31, %38 : vector<4x4x128xf32>
    %40 = vector.extract_strided_slice %7 {offsets = [16, 0], sizes = [4, 128], strides = [1, 1]} : vector<32x128xf32> to vector<4x128xf32>
    %41 = vector.extract_strided_slice %6 {offsets = [16, 0], sizes = [4, 128], strides = [1, 1]} : vector<32x128xf32> to vector<4x128xf32>
    %42 = vector.shape_cast %40 : vector<4x128xf32> to vector<4x1x128xf32>
    %43 = vector.shape_cast %41 : vector<4x128xf32> to vector<1x4x128xf32>
    %44 = vector.broadcast %42 : vector<4x1x128xf32> to vector<4x4x128xf32>
    %45 = vector.broadcast %43 : vector<1x4x128xf32> to vector<4x4x128xf32>
    %46 = arith.mulf %44, %45 : vector<4x4x128xf32>
    %47 = arith.addf %39, %46 : vector<4x4x128xf32>
    %48 = vector.extract_strided_slice %7 {offsets = [20, 0], sizes = [4, 128], strides = [1, 1]} : vector<32x128xf32> to vector<4x128xf32>
    %49 = vector.extract_strided_slice %6 {offsets = [20, 0], sizes = [4, 128], strides = [1, 1]} : vector<32x128xf32> to vector<4x128xf32>
    %50 = vector.shape_cast %48 : vector<4x128xf32> to vector<4x1x128xf32>
    %51 = vector.shape_cast %49 : vector<4x128xf32> to vector<1x4x128xf32>
    %52 = vector.broadcast %50 : vector<4x1x128xf32> to vector<4x4x128xf32>
    %53 = vector.broadcast %51 : vector<1x4x128xf32> to vector<4x4x128xf32>
    %54 = arith.mulf %52, %53 : vector<4x4x128xf32>
    %55 = arith.addf %47, %54 : vector<4x4x128xf32>
    %56 = vector.extract_strided_slice %7 {offsets = [24, 0], sizes = [4, 128], strides = [1, 1]} : vector<32x128xf32> to vector<4x128xf32>
    %57 = vector.extract_strided_slice %6 {offsets = [24, 0], sizes = [4, 128], strides = [1, 1]} : vector<32x128xf32> to vector<4x128xf32>
    %58 = vector.shape_cast %56 : vector<4x128xf32> to vector<4x1x128xf32>
    %59 = vector.shape_cast %57 : vector<4x128xf32> to vector<1x4x128xf32>
    %60 = vector.broadcast %58 : vector<4x1x128xf32> to vector<4x4x128xf32>
    %61 = vector.broadcast %59 : vector<1x4x128xf32> to vector<4x4x128xf32>
    %62 = arith.mulf %60, %61 : vector<4x4x128xf32>
    %63 = arith.addf %55, %62 : vector<4x4x128xf32>
    %64 = vector.extract_strided_slice %7 {offsets = [28, 0], sizes = [4, 128], strides = [1, 1]} : vector<32x128xf32> to vector<4x128xf32>
    %65 = vector.extract_strided_slice %6 {offsets = [28, 0], sizes = [4, 128], strides = [1, 1]} : vector<32x128xf32> to vector<4x128xf32>
    %66 = vector.shape_cast %64 : vector<4x128xf32> to vector<4x1x128xf32>
    %67 = vector.shape_cast %65 : vector<4x128xf32> to vector<1x4x128xf32>
    %68 = vector.broadcast %66 : vector<4x1x128xf32> to vector<4x4x128xf32>
    %69 = vector.broadcast %67 : vector<1x4x128xf32> to vector<4x4x128xf32>
    %70 = arith.mulf %68, %69 : vector<4x4x128xf32>
    %71 = arith.addf %63, %70 : vector<4x4x128xf32>
    %cst_5 = arith.constant dense<0xFF800000> : vector<4x128xf32>
    %72 = vector.multi_reduction <maximumf>, %71, %cst_5 [0] : vector<4x4x128xf32> to vector<4x128xf32>
    %73 = vector.shape_cast %72 : vector<4x128xf32> to vector<1x4x128xf32>
    %74 = vector.broadcast %73 : vector<1x4x128xf32> to vector<4x4x128xf32>
    %75 = arith.subf %71, %74 : vector<4x4x128xf32>
    %76 = math.exp %75 : vector<4x4x128xf32>
    %cst_6 = arith.constant dense<0.000000e+00> : vector<4x128xf32>
    %77 = vector.multi_reduction <add>, %76, %cst_6 [0] : vector<4x4x128xf32> to vector<4x128xf32>
    %78 = vector.shape_cast %77 : vector<4x128xf32> to vector<1x4x128xf32>
    %79 = tpu.reciprocal %78 : vector<1x4x128xf32> -> vector<1x4x128xf32>
    %80 = vector.broadcast %79 : vector<1x4x128xf32> to vector<4x4x128xf32>
    %81 = arith.mulf %76, %80 : vector<4x4x128xf32>
    %82 = vector.extract_strided_slice %8 {offsets = [0, 0], sizes = [4, 128], strides = [1, 1]} : vector<32x128xf32> to vector<4x128xf32>
    %83 = vector.shape_cast %82 : vector<4x128xf32> to vector<4x1x128xf32>
    %84 = vector.broadcast %83 : vector<4x1x128xf32> to vector<4x4x128xf32>
    %85 = arith.mulf %84, %81 : vector<4x4x128xf32>
    %cst_7 = arith.constant dense<0.000000e+00> : vector<4x128xf32>
    %86 = vector.multi_reduction <add>, %85, %cst_7 [0] : vector<4x4x128xf32> to vector<4x128xf32>
    %87 = vector.extract_strided_slice %8 {offsets = [4, 0], sizes = [4, 128], strides = [1, 1]} : vector<32x128xf32> to vector<4x128xf32>
    %88 = vector.shape_cast %87 : vector<4x128xf32> to vector<4x1x128xf32>
    %89 = vector.broadcast %88 : vector<4x1x128xf32> to vector<4x4x128xf32>
    %90 = arith.mulf %89, %81 : vector<4x4x128xf32>
    %cst_8 = arith.constant dense<0.000000e+00> : vector<4x128xf32>
    %91 = vector.multi_reduction <add>, %90, %cst_8 [0] : vector<4x4x128xf32> to vector<4x128xf32>
    %92 = vector.extract_strided_slice %8 {offsets = [8, 0], sizes = [4, 128], strides = [1, 1]} : vector<32x128xf32> to vector<4x128xf32>
    %93 = vector.shape_cast %92 : vector<4x128xf32> to vector<4x1x128xf32>
    %94 = vector.broadcast %93 : vector<4x1x128xf32> to vector<4x4x128xf32>
    %95 = arith.mulf %94, %81 : vector<4x4x128xf32>
    %cst_9 = arith.constant dense<0.000000e+00> : vector<4x128xf32>
    %96 = vector.multi_reduction <add>, %95, %cst_9 [0] : vector<4x4x128xf32> to vector<4x128xf32>
    %97 = vector.extract_strided_slice %8 {offsets = [12, 0], sizes = [4, 128], strides = [1, 1]} : vector<32x128xf32> to vector<4x128xf32>
    %98 = vector.shape_cast %97 : vector<4x128xf32> to vector<4x1x128xf32>
    %99 = vector.broadcast %98 : vector<4x1x128xf32> to vector<4x4x128xf32>
    %100 = arith.mulf %99, %81 : vector<4x4x128xf32>
    %cst_10 = arith.constant dense<0.000000e+00> : vector<4x128xf32>
    %101 = vector.multi_reduction <add>, %100, %cst_10 [0] : vector<4x4x128xf32> to vector<4x128xf32>
    %102 = vector.extract_strided_slice %8 {offsets = [16, 0], sizes = [4, 128], strides = [1, 1]} : vector<32x128xf32> to vector<4x128xf32>
    %103 = vector.shape_cast %102 : vector<4x128xf32> to vector<4x1x128xf32>
    %104 = vector.broadcast %103 : vector<4x1x128xf32> to vector<4x4x128xf32>
    %105 = arith.mulf %104, %81 : vector<4x4x128xf32>
    %cst_11 = arith.constant dense<0.000000e+00> : vector<4x128xf32>
    %106 = vector.multi_reduction <add>, %105, %cst_11 [0] : vector<4x4x128xf32> to vector<4x128xf32>
    %107 = vector.extract_strided_slice %8 {offsets = [20, 0], sizes = [4, 128], strides = [1, 1]} : vector<32x128xf32> to vector<4x128xf32>
    %108 = vector.shape_cast %107 : vector<4x128xf32> to vector<4x1x128xf32>
    %109 = vector.broadcast %108 : vector<4x1x128xf32> to vector<4x4x128xf32>
    %110 = arith.mulf %109, %81 : vector<4x4x128xf32>
    %cst_12 = arith.constant dense<0.000000e+00> : vector<4x128xf32>
    %111 = vector.multi_reduction <add>, %110, %cst_12 [0] : vector<4x4x128xf32> to vector<4x128xf32>
    %112 = vector.extract_strided_slice %8 {offsets = [24, 0], sizes = [4, 128], strides = [1, 1]} : vector<32x128xf32> to vector<4x128xf32>
    %113 = vector.shape_cast %112 : vector<4x128xf32> to vector<4x1x128xf32>
    %114 = vector.broadcast %113 : vector<4x1x128xf32> to vector<4x4x128xf32>
    %115 = arith.mulf %114, %81 : vector<4x4x128xf32>
    %cst_13 = arith.constant dense<0.000000e+00> : vector<4x128xf32>
    %116 = vector.multi_reduction <add>, %115, %cst_13 [0] : vector<4x4x128xf32> to vector<4x128xf32>
    %117 = vector.extract_strided_slice %8 {offsets = [28, 0], sizes = [4, 128], strides = [1, 1]} : vector<32x128xf32> to vector<4x128xf32>
    %118 = vector.shape_cast %117 : vector<4x128xf32> to vector<4x1x128xf32>
    %119 = vector.broadcast %118 : vector<4x1x128xf32> to vector<4x4x128xf32>
    %120 = arith.mulf %119, %81 : vector<4x4x128xf32>
    %cst_14 = arith.constant dense<0.000000e+00> : vector<4x128xf32>
    %121 = vector.multi_reduction <add>, %120, %cst_14 [0] : vector<4x4x128xf32> to vector<4x128xf32>
    %122 = tpu.concatenate %86, %91, %96, %101, %106, %111, %116, %121 in 0 : vector<4x128xf32>, vector<4x128xf32>, vector<4x128xf32>, vector<4x128xf32>, vector<4x128xf32>, vector<4x128xf32>, vector<4x128xf32>, vector<4x128xf32> -> vector<32x128xf32>
    %c0_15 = arith.constant 0 : index
    %c0_16 = arith.constant 0 : index
    %123 = vector.load %arg4[%c0_15, %c0_16] : memref<4x32xf32, #tpu.memory_space<vmem>>, vector<4x32xf32>
    %cst_17 = arith.constant dense<0.000000e+00> : vector<4x128xf32>
    %124 = tpu.matmul %123, %122, %cst_17 {dimension_numbers = #tpu.dot_dimension_numbers<[1], [0], [0], [1], [0, 0, 1, 1], [], []>} : vector<4x32xf32>, vector<32x128xf32>, vector<4x128xf32> -> vector<4x128xf32>
    %c0_18 = arith.constant 0 : index
    %c0_19 = arith.constant 0 : index
    %125 = vector.load %arg5[%c0_18, %c0_19] : memref<4x1xf32, #tpu.memory_space<vmem>>, vector<4x1xf32>
    %126 = vector.broadcast %125 : vector<4x1xf32> to vector<4x128xf32>
    %127 = arith.addf %124, %126 : vector<4x128xf32>
    %c0_20 = arith.constant 0 : index
    %c0_21 = arith.constant 0 : index
    %128 = vector.load %arg6[%c0_20, %c0_21] : memref<4x128xf32, #tpu.memory_space<vmem>>, vector<4x128xf32>
    tpu.vector_store %arg6[%c0_20, %c0_21], %127 {strides = array<i32>} : memref<4x128xf32, #tpu.memory_space<vmem>>, vector<4x128xf32>,
    return
  }
  func.func @transform_0(%arg0: i32) -> (i32, i32) {
    %c0_i32 = arith.constant 0 : i32
    %c0_i32_0 = arith.constant 0 : i32
    return %c0_i32, %arg0 : i32, i32
  }
  func.func @transform_1(%arg0: i32) -> (i32, i32) {
    %c0_i32 = arith.constant 0 : i32
    %c0_i32_0 = arith.constant 0 : i32
    %c0_i32_1 = arith.constant 0 : i32
    return %c0_i32, %c0_i32_0 : i32, i32
  }
  func.func @transform_2(%arg0: i32) -> (i32, i32) {
    %c0_i32 = arith.constant 0 : i32
    %c0_i32_0 = arith.constant 0 : i32
    %c0_i32_1 = arith.constant 0 : i32
    return %c0_i32, %c0_i32_0 : i32, i32
  }
  func.func @transform_3(%arg0: i32) -> (i32, i32) {
    %c0_i32 = arith.constant 0 : i32
    %c0_i32_0 = arith.constant 0 : i32
    %c0_i32_1 = arith.constant 0 : i32
    return %c0_i32, %c0_i32_0 : i32, i32
  }
  func.func @transform_4(%arg0: i32) -> (i32, i32) {
    %c0_i32 = arith.constant 0 : i32
    %c0_i32_0 = arith.constant 0 : i32
    %c0_i32_1 = arith.constant 0 : i32
    return %c0_i32, %c0_i32_0 : i32, i32
  }
  func.func @transform_5(%arg0: i32) -> (i32, i32) {
    %c0_i32 = arith.constant 0 : i32
    %c0_i32_0 = arith.constant 0 : i32
    return %c0_i32, %arg0 : i32, i32
  }
}

</mosaic_0001>

<llo_original>
// kernel: tpu_custom_call.1
$region0: #{tpu_custom_call.1}
  #allocation0 [shape = 'u32[]', space=smem, size = 0x4, offset = 0x4, fixed_abs, tag = 'smem constant byte address 0x4 - core index']
  #allocation1 [shape = 'u32[144,128]{1,0:T(1,128)}', space=vmem, size = 0x12000, scoped, tag = 'internal scratch']
  %s0 = inlined_call_operand.vmem [shape: f32[32,128], index: 0, kind: input, shape index: {}]
  %s1 = inlined_call_operand.vmem [shape: f32[96,32], index: 1, kind: input, shape index: {}]
  %s2 = inlined_call_operand.vmem [shape: f32[96,1], index: 2, kind: input, shape index: {}]
  %s3 = inlined_call_operand.vmem [shape: f32[4,32], index: 3, kind: input, shape index: {}]
  %s4 = inlined_call_operand.vmem [shape: f32[4,1], index: 4, kind: input, shape index: {}]
  %s5 = inlined_call_operand.hbm [shape: f32[4,128], index: 5, kind: output, shape index: {}]
  %s6 = sld [smem:[#allocation0]]
  $region30: #{tpu_custom_call.1} parent=0
    _
  %s8 = ssub.s32 1, %s6
  %s9 = scalar_select 0, %s8, %s6
  $region1: #{tpu_custom_call.1} parent=0
    #allocation2 [shape = 'u8[2048]{0}', space=vmem, size = 0x800, scoped, tag = 'output window, operand 0, single buffered']
    #allocation3 [shape = 's32[1]{0}', space=sflag, size = 0x4, scoped, tag = 'scoped memory for tpu_custom_call.1']
    %10 = vsyncpa [#allocation3], 0
    // Predicated region
    $region2: #{tpu_custom_call.1} parent=1 // pred_check
      _
    $region3: #{tpu_custom_call.1} parent=1 // pred_check_branch
      %12 = sbr.rel (0) target = $region5
    $region4: #{tpu_custom_call.1} parent=1 // pred_region
      _
    $region5: #{tpu_custom_call.1} parent=1 // pred_fallthru
      _
    // Predicated region
    $region6: #{tpu_custom_call.1} parent=1 // pred_check
      _
    $region7: #{tpu_custom_call.1} parent=1 // pred_check_branch
      %14 = sbr.rel (0) target = $region9
    $region8: #{tpu_custom_call.1} parent=1 // pred_region
      _
    $region9: #{tpu_custom_call.1} parent=1 // pred_fallthru
      _
    // Predicated region
    $region10: #{tpu_custom_call.1} parent=1 // pred_check
      _
    $region11: #{tpu_custom_call.1} parent=1 // pred_check_branch
      %16 = sbr.rel (0) target = $region13
    $region12: #{tpu_custom_call.1} parent=1 // pred_region
      _
    $region13: #{tpu_custom_call.1} parent=1 // pred_fallthru
      _
    // Predicated region
    $region14: #{tpu_custom_call.1} parent=1 // pred_check
      _
    $region15: #{tpu_custom_call.1} parent=1 // pred_check_branch
      %18 = sbr.rel (0) target = $region17
    $region16: #{tpu_custom_call.1} parent=1 // pred_region
      _
    $region17: #{tpu_custom_call.1} parent=1 // pred_fallthru
      _
    // Predicated region
    $region18: #{tpu_custom_call.1} parent=1 // pred_check
      _
    $region19: #{tpu_custom_call.1} parent=1 // pred_check_branch
      %20 = sbr.rel (0) target = $region21
    $region20: #{tpu_custom_call.1} parent=1 // pred_region
      _
    $region21: #{tpu_custom_call.1} parent=1 // pred_fallthru
      _
    %v21 = vld [vmem:[%s0] sm:$0xff]
    %v22 = vld [vmem:[%s0 + $0x8] sm:$0xff]
    %v23 = vld [vmem:[%s0 + $0x10] sm:$0xff]
    %v24 = vld [vmem:[%s0 + $0x18] sm:$0xff]
    %v25 = vld [vmem:[%s1] sm:$0xff]
    %v26 = vld [vmem:[%s1 + $0x8] sm:$0xff]
    %v27 = vld [vmem:[%s1 + $0x10] sm:$0xff]
    %v28 = vld [vmem:[%s1 + $0x18] sm:$0xff]
    %v29 = vld [vmem:[%s1 + $0x20] sm:$0xff]
    %v30 = vld [vmem:[%s1 + $0x28] sm:$0xff]
    %v31 = vld [vmem:[%s1 + $0x30] sm:$0xff]
    %v32 = vld [vmem:[%s1 + $0x38] sm:$0xff]
    %v33 = vld [vmem:[%s1 + $0x40] sm:$0xff]
    %v34 = vld [vmem:[%s1 + $0x48] sm:$0xff]
    %v35 = vld [vmem:[%s1 + $0x50] sm:$0xff]
    %v36 = vld [vmem:[%s1 + $0x58] sm:$0xff]
    %v37 = vld [vmem:[%s2] sm:$0xff]
    %v38 = vld [vmem:[%s2 + $0x8] sm:$0xff]
    %v39 = vld [vmem:[%s2 + $0x10] sm:$0xff]
    %v40 = vld [vmem:[%s2 + $0x18] sm:$0xff]
    %v41 = vld [vmem:[%s2 + $0x20] sm:$0xff]
    %v42 = vld [vmem:[%s2 + $0x28] sm:$0xff]
    %v43 = vld [vmem:[%s2 + $0x30] sm:$0xff]
    %v44 = vld [vmem:[%s2 + $0x38] sm:$0xff]
    %v45 = vld [vmem:[%s2 + $0x40] sm:$0xff]
    %v46 = vld [vmem:[%s2 + $0x48] sm:$0xff]
    %v47 = vld [vmem:[%s2 + $0x50] sm:$0xff]
    %v48 = vld [vmem:[%s2 + $0x58] sm:$0xff]
    %50 = vset.pattern.permute.xlu0 0
    %51 = vperm.xlu0 %50, %v37
    %v52 = vpop.permute.xlu0 %51
    %55 = vset.pattern.permute.xlu0 0
    %56 = vperm.xlu0 %55, %v38
    %v57 = vpop.permute.xlu0 %56
    %60 = vset.pattern.permute.xlu0 0
    %61 = vperm.xlu0 %60, %v39
    %v62 = vpop.permute.xlu0 %61
    %65 = vset.pattern.permute.xlu0 0
    %66 = vperm.xlu0 %65, %v40
    %v67 = vpop.permute.xlu0 %66
    %70 = vset.pattern.permute.xlu0 0
    %71 = vperm.xlu0 %70, %v41
    %v72 = vpop.permute.xlu0 %71
    %75 = vset.pattern.permute.xlu0 0
    %76 = vperm.xlu0 %75, %v42
    %v77 = vpop.permute.xlu0 %76
    %80 = vset.pattern.permute.xlu0 0
    %81 = vperm.xlu0 %80, %v43
    %v82 = vpop.permute.xlu0 %81
    %85 = vset.pattern.permute.xlu0 0
    %86 = vperm.xlu0 %85, %v44
    %v87 = vpop.permute.xlu0 %86
    %90 = vset.pattern.permute.xlu0 0
    %91 = vperm.xlu0 %90, %v45
    %v92 = vpop.permute.xlu0 %91
    %95 = vset.pattern.permute.xlu0 0
    %96 = vperm.xlu0 %95, %v46
    %v97 = vpop.permute.xlu0 %96
    %100 = vset.pattern.permute.xlu0 0
    %101 = vperm.xlu0 %100, %v47
    %v102 = vpop.permute.xlu0 %101
    %105 = vset.pattern.permute.xlu0 0
    %106 = vperm.xlu0 %105, %v48
    %v107 = vpop.permute.xlu0 %106
    %vm109 = vcmask 261120
    %v111 = vsel %vm109, %v25, 0
    %v114 = vsel %vm109, %v26, 0
    %v117 = vsel %vm109, %v27, 0
    %v120 = vsel %vm109, %v28, 0
    %v123 = vsel %vm109, %v29, 0
    %v126 = vsel %vm109, %v30, 0
    %v129 = vsel %vm109, %v31, 0
    %v132 = vsel %vm109, %v32, 0
    %v135 = vsel %vm109, %v33, 0
    %v138 = vsel %vm109, %v34, 0
    %v141 = vsel %vm109, %v35, 0
    %v144 = vsel %vm109, %v36, 0
    %146 = vmatprep.subr.mxu0 0.0
    %147 = vmatpush1.msra.mxu0 %v21
    %148 = vmatprep.subr.mxu0 0.0
    %149 = vmatpush1.msra.mxu0 %v22
    %150 = vmatprep.subr.mxu0 0.0
    %151 = vmatpush1.msra.mxu0 %v23
    %152 = vmatprep.subr.mxu0 0.0
    %153 = vmatpush1.msra.mxu0 %v24
    %154 = vmatprep.subr.mxu0 0.0
    %155 = vmatpush1.msra.mxu0 0.0
    %156 = vmatprep.subr.mxu0 0.0
    %157 = vmatpush1.msra.mxu0 0.0
    %158 = vmatprep.subr.mxu0 0.0
    %159 = vmatpush1.msra.mxu0 0.0
    %160 = vmatprep.subr.mxu0 0.0
    %161 = vmatpush1.msra.mxu0 0.0
    %162 = vmatprep.subr.mxu0 0.0
    %163 = vmatpush1.msra.mxu0 0.0
    %164 = vmatprep.subr.mxu0 0.0
    %165 = vmatpush1.msra.mxu0 0.0
    %166 = vmatprep.subr.mxu0 0.0
    %167 = vmatpush1.msra.mxu0 0.0
    %168 = vmatprep.subr.mxu0 0.0
    %169 = vmatpush1.msra.mxu0 0.0
    %170 = vmatprep.subr.mxu0 0.0
    %171 = vmatpush1.msra.mxu0 0.0
    %172 = vmatprep.subr.mxu0 0.0
    %173 = vmatpush1.msra.mxu0 0.0
    %174 = vmatprep.subr.mxu0 0.0
    %175 = vmatpush1.msra.mxu0 0.0
    %176 = vmatprep.subr.mxu0 0.0
    %177 = vmatpush1.msra.mxu0 0.0
    %178 = vmatprep.subr.mxu0 0.0
    %179 = vmatpush1.msra.mxu0 0.0
    %180 = vmatprep.subr.mxu0 0.0
    %181 = vmatpush1.msra.mxu0 0.0
    %182 = vmatprep.subr.mxu0 0.0
    %183 = vmatpush1.msra.mxu0 0.0
    %184 = vmatprep.subr.mxu0 0.0
    %185 = vmatpush1.msra.mxu0 0.0
    %186 = vmatprep.subr.mxu0 0.0
    %187 = vmatpush1.msra.mxu0 0.0
    %188 = vmatprep.subr.mxu0 0.0
    %189 = vmatpush1.msra.mxu0 0.0
    %190 = vmatprep.subr.mxu0 0.0
    %191 = vmatpush1.msra.mxu0 0.0
    %192 = vmatprep.subr.mxu0 0.0
    %193 = vmatpush1.msra.mxu0 0.0
    %194 = vmatprep.subr.mxu0 0.0
    %195 = vmatpush1.msra.mxu0 0.0
    %196 = vmatprep.subr.mxu0 0.0
    %197 = vmatpush1.msra.mxu0 0.0
    %198 = vmatprep.subr.mxu0 0.0
    %199 = vmatpush1.msra.mxu0 0.0
    %200 = vmatprep.subr.mxu0 0.0
    %201 = vmatpush1.msra.mxu0 0.0
    %202 = vmatprep.subr.mxu0 0.0
    %203 = vmatpush1.msra.mxu0 0.0
    %204 = vmatprep.subr.mxu0 0.0
    %205 = vmatpush1.msra.mxu0 0.0
    %206 = vmatprep.subr.mxu0 0.0
    %207 = vmatpush1.msra.mxu0 0.0
    %208 = vmatprep.subr.mxu0 0.0
    %209 = vmatpush1.msra.mxu0 0.0
    %210 = vmatprep.mubr.f32.mxu0 0.0
    %211 = vmatmul.mubr.f32.gmra.mrb[0].mxu0 %v111
    %v212 = vpop.f32.mrb[0].mxu0
    %v213 = vadd.f32 %v52, %v212
    %v214 = vpop.f32.mrb[0].mxu0
    %215 = vmatprep.mubr.f32.mxu0 0.0
    %216 = vmatmul.mubr.f32.gmra.mrb[0].mxu0 %v114
    %v217 = vpop.f32.mrb[0].mxu0
    %v218 = vadd.f32 %v57, %v217
    %v219 = vpop.f32.mrb[0].mxu0
    %220 = vmatprep.mubr.f32.mxu0 0.0
    %221 = vmatmul.mubr.f32.gmra.mrb[0].mxu0 %v117
    %v222 = vpop.f32.mrb[0].mxu0
    %v223 = vadd.f32 %v62, %v222
    %v224 = vpop.f32.mrb[0].mxu0
    %225 = vmatprep.mubr.f32.mxu0 0.0
    %226 = vmatmul.mubr.f32.gmra.mrb[0].mxu0 %v120
    %v227 = vpop.f32.mrb[0].mxu0
    %v228 = vadd.f32 %v67, %v227
    %v229 = vpop.f32.mrb[0].mxu0
    %230 = vmatprep.mubr.f32.mxu0 0.0
    %231 = vmatmul.mubr.f32.gmra.mrb[0].mxu0 %v123
    %v232 = vpop.f32.mrb[0].mxu0
    %v233 = vadd.f32 %v72, %v232
    %v234 = vpop.f32.mrb[0].mxu0
    %235 = vmatprep.mubr.f32.mxu0 0.0
    %236 = vmatmul.mubr.f32.gmra.mrb[0].mxu0 %v126
    %v237 = vpop.f32.mrb[0].mxu0
    %v238 = vadd.f32 %v77, %v237
    %v239 = vpop.f32.mrb[0].mxu0
    %240 = vmatprep.mubr.f32.mxu0 0.0
    %241 = vmatmul.mubr.f32.gmra.mrb[0].mxu0 %v129
    %v242 = vpop.f32.mrb[0].mxu0
    %v243 = vadd.f32 %v82, %v242
    %v244 = vpop.f32.mrb[0].mxu0
    %245 = vmatprep.mubr.f32.mxu0 0.0
    %246 = vmatmul.mubr.f32.gmra.mrb[0].mxu0 %v132
    %v247 = vpop.f32.mrb[0].mxu0
    %v248 = vadd.f32 %v87, %v247
    %v249 = vpop.f32.mrb[0].mxu0
    %250 = vmatprep.mubr.f32.mxu0 0.0
    %251 = vmatmul.mubr.f32.gmra.mrb[0].mxu0 %v135
    %v252 = vpop.f32.mrb[0].mxu0
    %v253 = vadd.f32 %v92, %v252
    %v254 = vpop.f32.mrb[0].mxu0
    %255 = vmatprep.mubr.f32.mxu0 0.0
    %256 = vmatmul.mubr.f32.gmra.mrb[0].mxu0 %v138
    %v257 = vpop.f32.mrb[0].mxu0
    %v258 = vadd.f32 %v97, %v257
    %v259 = vpop.f32.mrb[0].mxu0
    %260 = vmatprep.mubr.f32.mxu0 0.0
    %261 = vmatmul.mubr.f32.gmra.mrb[0].mxu0 %v141
    %v262 = vpop.f32.mrb[0].mxu0
    %v263 = vadd.f32 %v102, %v262
    %v264 = vpop.f32.mrb[0].mxu0
    %265 = vmatprep.mubr.f32.mxu0 0.0
    %266 = vmatmul.mubr.f32.gmra.mrb[0].mxu0 %v144
    %v267 = vpop.f32.mrb[0].mxu0
    %v268 = vadd.f32 %v107, %v267
    %v269 = vpop.f32.mrb[0].mxu0
    %270 = vdwg.mxu0
    %v273 = vunpack.c.l.s4 1966171168
    %v274 = vunpack.c.0.s8 %v273
    %v275 = vlaneseq
    %v276 = vshrl.u32 %v275, 7
    %v277 = vsub.s32 %v274, %v276
    %v278 = vrot.slane %v233, %v277
    %v279 = vcombine.high %v278, %v278
    %v281 = vunpack.c.l.s4 1966171168
    %v282 = vunpack.c.0.s8 %v281
    %v283 = vlaneseq
    %v284 = vshrl.u32 %v283, 7
    %v285 = vsub.s32 %v282, %v284
    %v286 = vrot.slane %v278, %v285
    %v288 = vunpack.c.l.s4 1966171168
    %v289 = vunpack.c.0.s8 %v288
    %v290 = vlaneseq
    %v291 = vshrl.u32 %v290, 7
    %v292 = vsub.s32 %v289, %v291
    %v293 = vrot.slane %v279, %v292
    %v294 = vcombine.high %v286, %v286
    %v295 = vcombine.high %v293, %v293
    %v296 = vlaneseq
    %v297 = vshrl.u32 %v296, 7
    %v298 = vsub.s32 0, %v297
    %v299 = vrot.slane %v286, %v298
    %v300 = vlaneseq
    %v301 = vshrl.u32 %v300, 7
    %v302 = vsub.s32 0, %v301
    %v303 = vrot.slane %v293, %v302
    %v304 = vlaneseq
    %v305 = vshrl.u32 %v304, 7
    %v306 = vsub.s32 0, %v305
    %v307 = vrot.slane %v294, %v306
    %v308 = vlaneseq
    %v309 = vshrl.u32 %v308, 7
    %v310 = vsub.s32 0, %v309
    %v311 = vrot.slane %v295, %v310
    %v316 = vmul.f32 %v299, %v213
    %v317 = vmul.f32 %v303, %v213
    %v318 = vmul.f32 %v307, %v213
    %v319 = vmul.f32 %v311, %v213
    %v320 = vcombine.high %v233, %v233
    %v322 = vunpack.c.l.s4 1966171168
    %v323 = vunpack.c.0.s8 %v322
    %v324 = vlaneseq
    %v325 = vshrl.u32 %v324, 7
    %v326 = vsub.s32 %v323, %v325
    %v327 = vrot.slane %v320, %v326
    %v328 = vcombine.high %v327, %v327
    %v330 = vunpack.c.l.s4 1966171168
    %v331 = vunpack.c.0.s8 %v330
    %v332 = vlaneseq
    %v333 = vshrl.u32 %v332, 7
    %v334 = vsub.s32 %v331, %v333
    %v335 = vrot.slane %v327, %v334
    %v337 = vunpack.c.l.s4 1966171168
    %v338 = vunpack.c.0.s8 %v337
    %v339 = vlaneseq
    %v340 = vshrl.u32 %v339, 7
    %v341 = vsub.s32 %v338, %v340
    %v342 = vrot.slane %v328, %v341
    %v343 = vcombine.high %v335, %v335
    %v344 = vcombine.high %v342, %v342
    %v345 = vlaneseq
    %v346 = vshrl.u32 %v345, 7
    %v347 = vsub.s32 0, %v346
    %v348 = vrot.slane %v335, %v347
    %v349 = vlaneseq
    %v350 = vshrl.u32 %v349, 7
    %v351 = vsub.s32 0, %v350
    %v352 = vrot.slane %v342, %v351
    %v353 = vlaneseq
    %v354 = vshrl.u32 %v353, 7
    %v355 = vsub.s32 0, %v354
    %v356 = vrot.slane %v343, %v355
    %v357 = vlaneseq
    %v358 = vshrl.u32 %v357, 7
    %v359 = vsub.s32 0, %v358
    %v360 = vrot.slane %v344, %v359
    %v365 = vmul.f32 %v348, %v213
    %v366 = vmul.f32 %v352, %v213
    %v367 = vmul.f32 %v356, %v213
    %v368 = vmul.f32 %v360, %v213
    %v373 = vrot.slane %v365, 4
    %v374 = vrot.slane %v366, 4
    %v375 = vrot.slane %v367, 4
    %v376 = vrot.slane %v368, 4
    %v381 = vadd.f32 %v316, %v373
    %v382 = vadd.f32 %v317, %v374
    %v383 = vadd.f32 %v318, %v375
    %v384 = vadd.f32 %v319, %v376
    %v387 = vunpack.c.l.s4 1966171168
    %v388 = vunpack.c.0.s8 %v387
    %v389 = vlaneseq
    %v390 = vshrl.u32 %v389, 7
    %v391 = vsub.s32 %v388, %v390
    %v392 = vrot.slane %v238, %v391
    %v393 = vcombine.high %v392, %v392
    %v395 = vunpack.c.l.s4 1966171168
    %v396 = vunpack.c.0.s8 %v395
    %v397 = vlaneseq
    %v398 = vshrl.u32 %v397, 7
    %v399 = vsub.s32 %v396, %v398
    %v400 = vrot.slane %v392, %v399
    %v402 = vunpack.c.l.s4 1966171168
    %v403 = vunpack.c.0.s8 %v402
    %v404 = vlaneseq
    %v405 = vshrl.u32 %v404, 7
    %v406 = vsub.s32 %v403, %v405
    %v407 = vrot.slane %v393, %v406
    %v408 = vcombine.high %v400, %v400
    %v409 = vcombine.high %v407, %v407
    %v410 = vlaneseq
    %v411 = vshrl.u32 %v410, 7
    %v412 = vsub.s32 0, %v411
    %v413 = vrot.slane %v400, %v412
    %v414 = vlaneseq
    %v415 = vshrl.u32 %v414, 7
    %v416 = vsub.s32 0, %v415
    %v417 = vrot.slane %v407, %v416
    %v418 = vlaneseq
    %v419 = vshrl.u32 %v418, 7
    %v420 = vsub.s32 0, %v419
    %v421 = vrot.slane %v408, %v420
    %v422 = vlaneseq
    %v423 = vshrl.u32 %v422, 7
    %v424 = vsub.s32 0, %v423
    %v425 = vrot.slane %v409, %v424
    %v430 = vmul.f32 %v413, %v218
    %v431 = vmul.f32 %v417, %v218
    %v432 = vmul.f32 %v421, %v218
    %v433 = vmul.f32 %v425, %v218
    %v434 = vadd.f32 %v381, %v430
    %v435 = vadd.f32 %v382, %v431
    %v436 = vadd.f32 %v383, %v432
    %v437 = vadd.f32 %v384, %v433
    %v438 = vcombine.high %v238, %v238
    %v440 = vunpack.c.l.s4 1966171168
    %v441 = vunpack.c.0.s8 %v440
    %v442 = vlaneseq
    %v443 = vshrl.u32 %v442, 7
    %v444 = vsub.s32 %v441, %v443
    %v445 = vrot.slane %v438, %v444
    %v446 = vcombine.high %v445, %v445
    %v448 = vunpack.c.l.s4 1966171168
    %v449 = vunpack.c.0.s8 %v448
    %v450 = vlaneseq
    %v451 = vshrl.u32 %v450, 7
    %v452 = vsub.s32 %v449, %v451
    %v453 = vrot.slane %v445, %v452
    %v455 = vunpack.c.l.s4 1966171168
    %v456 = vunpack.c.0.s8 %v455
    %v457 = vlaneseq
    %v458 = vshrl.u32 %v457, 7
    %v459 = vsub.s32 %v456, %v458
    %v460 = vrot.slane %v446, %v459
    %v461 = vcombine.high %v453, %v453
    %v462 = vcombine.high %v460, %v460
    %v463 = vlaneseq
    %v464 = vshrl.u32 %v463, 7
    %v465 = vsub.s32 0, %v464
    %v466 = vrot.slane %v453, %v465
    %v467 = vlaneseq
    %v468 = vshrl.u32 %v467, 7
    %v469 = vsub.s32 0, %v468
    %v470 = vrot.slane %v460, %v469
    %v471 = vlaneseq
    %v472 = vshrl.u32 %v471, 7
    %v473 = vsub.s32 0, %v472
    %v474 = vrot.slane %v461, %v473
    %v475 = vlaneseq
    %v476 = vshrl.u32 %v475, 7
    %v477 = vsub.s32 0, %v476
    %v478 = vrot.slane %v462, %v477
    %v483 = vmul.f32 %v466, %v218
    %v484 = vmul.f32 %v470, %v218
    %v485 = vmul.f32 %v474, %v218
    %v486 = vmul.f32 %v478, %v218
    %v491 = vrot.slane %v483, 4
    %v492 = vrot.slane %v484, 4
    %v493 = vrot.slane %v485, 4
    %v494 = vrot.slane %v486, 4
    %v499 = vadd.f32 %v434, %v491
    %v500 = vadd.f32 %v435, %v492
    %v501 = vadd.f32 %v436, %v493
    %v502 = vadd.f32 %v437, %v494
    %v505 = vunpack.c.l.s4 1966171168
    %v506 = vunpack.c.0.s8 %v505
    %v507 = vlaneseq
    %v508 = vshrl.u32 %v507, 7
    %v509 = vsub.s32 %v506, %v508
    %v510 = vrot.slane %v243, %v509
    %v511 = vcombine.high %v510, %v510
    %v513 = vunpack.c.l.s4 1966171168
    %v514 = vunpack.c.0.s8 %v513
    %v515 = vlaneseq
    %v516 = vshrl.u32 %v515, 7
    %v517 = vsub.s32 %v514, %v516
    %v518 = vrot.slane %v510, %v517
    %v520 = vunpack.c.l.s4 1966171168
    %v521 = vunpack.c.0.s8 %v520
    %v522 = vlaneseq
    %v523 = vshrl.u32 %v522, 7
    %v524 = vsub.s32 %v521, %v523
    %v525 = vrot.slane %v511, %v524
    %v526 = vcombine.high %v518, %v518
    %v527 = vcombine.high %v525, %v525
    %v528 = vlaneseq
    %v529 = vshrl.u32 %v528, 7
    %v530 = vsub.s32 0, %v529
    %v531 = vrot.slane %v518, %v530
    %v532 = vlaneseq
    %v533 = vshrl.u32 %v532, 7
    %v534 = vsub.s32 0, %v533
    %v535 = vrot.slane %v525, %v534
    %v536 = vlaneseq
    %v537 = vshrl.u32 %v536, 7
    %v538 = vsub.s32 0, %v537
    %v539 = vrot.slane %v526, %v538
    %v540 = vlaneseq
    %v541 = vshrl.u32 %v540, 7
    %v542 = vsub.s32 0, %v541
    %v543 = vrot.slane %v527, %v542
    %v548 = vmul.f32 %v531, %v223
    %v549 = vmul.f32 %v535, %v223
    %v550 = vmul.f32 %v539, %v223
    %v551 = vmul.f32 %v543, %v223
    %v552 = vadd.f32 %v499, %v548
    %v553 = vadd.f32 %v500, %v549
    %v554 = vadd.f32 %v501, %v550
    %v555 = vadd.f32 %v502, %v551
    %v556 = vcombine.high %v243, %v243
    %v558 = vunpack.c.l.s4 1966171168
    %v559 = vunpack.c.0.s8 %v558
    %v560 = vlaneseq
    %v561 = vshrl.u32 %v560, 7
    %v562 = vsub.s32 %v559, %v561
    %v563 = vrot.slane %v556, %v562
    %v564 = vcombine.high %v563, %v563
    %v566 = vunpack.c.l.s4 1966171168
    %v567 = vunpack.c.0.s8 %v566
    %v568 = vlaneseq
    %v569 = vshrl.u32 %v568, 7
    %v570 = vsub.s32 %v567, %v569
    %v571 = vrot.slane %v563, %v570
    %v573 = vunpack.c.l.s4 1966171168
    %v574 = vunpack.c.0.s8 %v573
    %v575 = vlaneseq
    %v576 = vshrl.u32 %v575, 7
    %v577 = vsub.s32 %v574, %v576
    %v578 = vrot.slane %v564, %v577
    %v579 = vcombine.high %v571, %v571
    %v580 = vcombine.high %v578, %v578
    %v581 = vlaneseq
    %v582 = vshrl.u32 %v581, 7
    %v583 = vsub.s32 0, %v582
    %v584 = vrot.slane %v571, %v583
    %v585 = vlaneseq
    %v586 = vshrl.u32 %v585, 7
    %v587 = vsub.s32 0, %v586
    %v588 = vrot.slane %v578, %v587
    %v589 = vlaneseq
    %v590 = vshrl.u32 %v589, 7
    %v591 = vsub.s32 0, %v590
    %v592 = vrot.slane %v579, %v591
    %v593 = vlaneseq
    %v594 = vshrl.u32 %v593, 7
    %v595 = vsub.s32 0, %v594
    %v596 = vrot.slane %v580, %v595
    %v601 = vmul.f32 %v584, %v223
    %v602 = vmul.f32 %v588, %v223
    %v603 = vmul.f32 %v592, %v223
    %v604 = vmul.f32 %v596, %v223
    %v609 = vrot.slane %v601, 4
    %v610 = vrot.slane %v602, 4
    %v611 = vrot.slane %v603, 4
    %v612 = vrot.slane %v604, 4
    %v617 = vadd.f32 %v552, %v609
    %v618 = vadd.f32 %v553, %v610
    %v619 = vadd.f32 %v554, %v611
    %v620 = vadd.f32 %v555, %v612
    %v623 = vunpack.c.l.s4 1966171168
    %v624 = vunpack.c.0.s8 %v623
    %v625 = vlaneseq
    %v626 = vshrl.u32 %v625, 7
    %v627 = vsub.s32 %v624, %v626
    %v628 = vrot.slane %v248, %v627
    %v629 = vcombine.high %v628, %v628
    %v631 = vunpack.c.l.s4 1966171168
    %v632 = vunpack.c.0.s8 %v631
    %v633 = vlaneseq
    %v634 = vshrl.u32 %v633, 7
    %v635 = vsub.s32 %v632, %v634
    %v636 = vrot.slane %v628, %v635
    %v638 = vunpack.c.l.s4 1966171168
    %v639 = vunpack.c.0.s8 %v638
    %v640 = vlaneseq
    %v641 = vshrl.u32 %v640, 7
    %v642 = vsub.s32 %v639, %v641
    %v643 = vrot.slane %v629, %v642
    %v644 = vcombine.high %v636, %v636
    %v645 = vcombine.high %v643, %v643
    %v646 = vlaneseq
    %v647 = vshrl.u32 %v646, 7
    %v648 = vsub.s32 0, %v647
    %v649 = vrot.slane %v636, %v648
    %v650 = vlaneseq
    %v651 = vshrl.u32 %v650, 7
    %v652 = vsub.s32 0, %v651
    %v653 = vrot.slane %v643, %v652
    %v654 = vlaneseq
    %v655 = vshrl.u32 %v654, 7
    %v656 = vsub.s32 0, %v655
    %v657 = vrot.slane %v644, %v656
    %v658 = vlaneseq
    %v659 = vshrl.u32 %v658, 7
    %v660 = vsub.s32 0, %v659
    %v661 = vrot.slane %v645, %v660
    %v666 = vmul.f32 %v649, %v228
    %v667 = vmul.f32 %v653, %v228
    %v668 = vmul.f32 %v657, %v228
    %v669 = vmul.f32 %v661, %v228
    %v670 = vadd.f32 %v617, %v666
    %v671 = vadd.f32 %v618, %v667
    %v672 = vadd.f32 %v619, %v668
    %v673 = vadd.f32 %v620, %v669
    %v674 = vcombine.high %v248, %v248
    %v676 = vunpack.c.l.s4 1966171168
    %v677 = vunpack.c.0.s8 %v676
    %v678 = vlaneseq
    %v679 = vshrl.u32 %v678, 7
    %v680 = vsub.s32 %v677, %v679
    %v681 = vrot.slane %v674, %v680
    %v682 = vcombine.high %v681, %v681
    %v684 = vunpack.c.l.s4 1966171168
    %v685 = vunpack.c.0.s8 %v684
    %v686 = vlaneseq
    %v687 = vshrl.u32 %v686, 7
    %v688 = vsub.s32 %v685, %v687
    %v689 = vrot.slane %v681, %v688
    %v691 = vunpack.c.l.s4 1966171168
    %v692 = vunpack.c.0.s8 %v691
    %v693 = vlaneseq
    %v694 = vshrl.u32 %v693, 7
    %v695 = vsub.s32 %v692, %v694
    %v696 = vrot.slane %v682, %v695
    %v697 = vcombine.high %v689, %v689
    %v698 = vcombine.high %v696, %v696
    %v699 = vlaneseq
    %v700 = vshrl.u32 %v699, 7
    %v701 = vsub.s32 0, %v700
    %v702 = vrot.slane %v689, %v701
    %v703 = vlaneseq
    %v704 = vshrl.u32 %v703, 7
    %v705 = vsub.s32 0, %v704
    %v706 = vrot.slane %v696, %v705
    %v707 = vlaneseq
    %v708 = vshrl.u32 %v707, 7
    %v709 = vsub.s32 0, %v708
    %v710 = vrot.slane %v697, %v709
    %v711 = vlaneseq
    %v712 = vshrl.u32 %v711, 7
    %v713 = vsub.s32 0, %v712
    %v714 = vrot.slane %v698, %v713
    %v719 = vmul.f32 %v702, %v228
    %v720 = vmul.f32 %v706, %v228
    %v721 = vmul.f32 %v710, %v228
    %v722 = vmul.f32 %v714, %v228
    %v727 = vrot.slane %v719, 4
    %v728 = vrot.slane %v720, 4
    %v729 = vrot.slane %v721, 4
    %v730 = vrot.slane %v722, 4
    %v735 = vadd.f32 %v670, %v727
    %v736 = vadd.f32 %v671, %v728
    %v737 = vadd.f32 %v672, %v729
    %v738 = vadd.f32 %v673, %v730
    %vm739 = vcmask 1043456
    %v740 = vsel %vm739, %v735, -inf
    %v741 = vsel %vm739, %v736, -inf
    %v742 = vsel %vm739, %v737, -inf
    %v743 = vsel %vm739, %v738, -inf
    %v744 = vmax.f32 %v740, %v741
    %v745 = vmax.f32 %v742, %v743
    %v746 = vmax.f32 %v744, %v745
    %v747 = vsub.f32 %v735, %v746
    %v748 = vsub.f32 %v736, %v746
    %v749 = vsub.f32 %v737, %v746
    %v750 = vsub.f32 %v738, %v746
    %v751 = vmul.f32 %v747, 1.442695
    %v752 = vpow.pop %v751
    %v753 = vmul.f32 %v748, 1.442695
    %v754 = vpow.pop %v753
    %v755 = vmul.f32 %v749, 1.442695
    %v756 = vpow.pop %v755
    %v757 = vmul.f32 %v750, 1.442695
    %v758 = vpow.pop %v757
    %v759 = vsel %vm739, %v752, 0.0
    %v760 = vsel %vm739, %v754, 0.0
    %v761 = vadd.f32 %v759, %v760
    %v762 = vsel %vm739, %v756, 0.0
    %v763 = vadd.f32 %v761, %v762
    %v764 = vsel %vm739, %v758, 0.0
    %v765 = vadd.f32 %v763, %v764
    %v766 = vrcp.pop %v765
    %v767 = vmul.f32 %v752, %v766
    %v768 = vmul.f32 %v754, %v766
    %v769 = vmul.f32 %v756, %v766
    %v770 = vmul.f32 %v758, %v766
    %v773 = vunpack.c.l.s4 1966171168
    %v774 = vunpack.c.0.s8 %v773
    %v775 = vlaneseq
    %v776 = vshrl.u32 %v775, 7
    %v777 = vsub.s32 %v774, %v776
    %v778 = vrot.slane %v253, %v777
    %v779 = vcombine.high %v778, %v778
    %v781 = vunpack.c.l.s4 1966171168
    %v782 = vunpack.c.0.s8 %v781
    %v783 = vlaneseq
    %v784 = vshrl.u32 %v783, 7
    %v785 = vsub.s32 %v782, %v784
    %v786 = vrot.slane %v778, %v785
    %v788 = vunpack.c.l.s4 1966171168
    %v789 = vunpack.c.0.s8 %v788
    %v790 = vlaneseq
    %v791 = vshrl.u32 %v790, 7
    %v792 = vsub.s32 %v789, %v791
    %v793 = vrot.slane %v779, %v792
    %v794 = vcombine.high %v786, %v786
    %v795 = vcombine.high %v793, %v793
    %v796 = vlaneseq
    %v797 = vshrl.u32 %v796, 7
    %v798 = vsub.s32 0, %v797
    %v799 = vrot.slane %v786, %v798
    %v800 = vlaneseq
    %v801 = vshrl.u32 %v800, 7
    %v802 = vsub.s32 0, %v801
    %v803 = vrot.slane %v793, %v802
    %v804 = vlaneseq
    %v805 = vshrl.u32 %v804, 7
    %v806 = vsub.s32 0, %v805
    %v807 = vrot.slane %v794, %v806
    %v808 = vlaneseq
    %v809 = vshrl.u32 %v808, 7
    %v810 = vsub.s32 0, %v809
    %v811 = vrot.slane %v795, %v810
    %v816 = vmul.f32 %v799, %v767
    %v817 = vmul.f32 %v803, %v768
    %v818 = vmul.f32 %v807, %v769
    %v819 = vmul.f32 %v811, %v770
    %v820 = vsel %vm739, %v816, 0.0
    %v821 = vsel %vm739, %v817, 0.0
    %v822 = vadd.f32 %v820, %v821
    %v823 = vsel %vm739, %v818, 0.0
    %v824 = vadd.f32 %v822, %v823
    %v825 = vsel %vm739, %v819, 0.0
    %v826 = vadd.f32 %v824, %v825
    %v827 = vcombine.high %v253, %v253
    %v829 = vunpack.c.l.s4 1966171168
    %v830 = vunpack.c.0.s8 %v829
    %v831 = vlaneseq
    %v832 = vshrl.u32 %v831, 7
    %v833 = vsub.s32 %v830, %v832
    %v834 = vrot.slane %v827, %v833
    %v835 = vcombine.high %v834, %v834
    %v837 = vunpack.c.l.s4 1966171168
    %v838 = vunpack.c.0.s8 %v837
    %v839 = vlaneseq
    %v840 = vshrl.u32 %v839, 7
    %v841 = vsub.s32 %v838, %v840
    %v842 = vrot.slane %v834, %v841
    %v844 = vunpack.c.l.s4 1966171168
    %v845 = vunpack.c.0.s8 %v844
    %v846 = vlaneseq
    %v847 = vshrl.u32 %v846, 7
    %v848 = vsub.s32 %v845, %v847
    %v849 = vrot.slane %v835, %v848
    %v850 = vcombine.high %v842, %v842
    %v851 = vcombine.high %v849, %v849
    %v852 = vlaneseq
    %v853 = vshrl.u32 %v852, 7
    %v854 = vsub.s32 0, %v853
    %v855 = vrot.slane %v842, %v854
    %v856 = vlaneseq
    %v857 = vshrl.u32 %v856, 7
    %v858 = vsub.s32 0, %v857
    %v859 = vrot.slane %v849, %v858
    %v860 = vlaneseq
    %v861 = vshrl.u32 %v860, 7
    %v862 = vsub.s32 0, %v861
    %v863 = vrot.slane %v850, %v862
    %v864 = vlaneseq
    %v865 = vshrl.u32 %v864, 7
    %v866 = vsub.s32 0, %v865
    %v867 = vrot.slane %v851, %v866
    %v872 = vmul.f32 %v855, %v767
    %v873 = vmul.f32 %v859, %v768
    %v874 = vmul.f32 %v863, %v769
    %v875 = vmul.f32 %v867, %v770
    %v876 = vsel %vm739, %v872, 0.0
    %v877 = vsel %vm739, %v873, 0.0
    %v878 = vadd.f32 %v876, %v877
    %v879 = vsel %vm739, %v874, 0.0
    %v880 = vadd.f32 %v878, %v879
    %v881 = vsel %vm739, %v875, 0.0
    %v882 = vadd.f32 %v880, %v881
    %v885 = vunpack.c.l.s4 1966171168
    %v886 = vunpack.c.0.s8 %v885
    %v887 = vlaneseq
    %v888 = vshrl.u32 %v887, 7
    %v889 = vsub.s32 %v886, %v888
    %v890 = vrot.slane %v258, %v889
    %v891 = vcombine.high %v890, %v890
    %v893 = vunpack.c.l.s4 1966171168
    %v894 = vunpack.c.0.s8 %v893
    %v895 = vlaneseq
    %v896 = vshrl.u32 %v895, 7
    %v897 = vsub.s32 %v894, %v896
    %v898 = vrot.slane %v890, %v897
    %v900 = vunpack.c.l.s4 1966171168
    %v901 = vunpack.c.0.s8 %v900
    %v902 = vlaneseq
    %v903 = vshrl.u32 %v902, 7
    %v904 = vsub.s32 %v901, %v903
    %v905 = vrot.slane %v891, %v904
    %v906 = vcombine.high %v898, %v898
    %v907 = vcombine.high %v905, %v905
    %v908 = vlaneseq
    %v909 = vshrl.u32 %v908, 7
    %v910 = vsub.s32 0, %v909
    %v911 = vrot.slane %v898, %v910
    %v912 = vlaneseq
    %v913 = vshrl.u32 %v912, 7
    %v914 = vsub.s32 0, %v913
    %v915 = vrot.slane %v905, %v914
    %v916 = vlaneseq
    %v917 = vshrl.u32 %v916, 7
    %v918 = vsub.s32 0, %v917
    %v919 = vrot.slane %v906, %v918
    %v920 = vlaneseq
    %v921 = vshrl.u32 %v920, 7
    %v922 = vsub.s32 0, %v921
    %v923 = vrot.slane %v907, %v922
    %v928 = vmul.f32 %v911, %v767
    %v929 = vmul.f32 %v915, %v768
    %v930 = vmul.f32 %v919, %v769
    %v931 = vmul.f32 %v923, %v770
    %v932 = vsel %vm739, %v928, 0.0
    %v933 = vsel %vm739, %v929, 0.0
    %v934 = vadd.f32 %v932, %v933
    %v935 = vsel %vm739, %v930, 0.0
    %v936 = vadd.f32 %v934, %v935
    %v937 = vsel %vm739, %v931, 0.0
    %v938 = vadd.f32 %v936, %v937
    %v939 = vcombine.high %v258, %v258
    %v941 = vunpack.c.l.s4 1966171168
    %v942 = vunpack.c.0.s8 %v941
    %v943 = vlaneseq
    %v944 = vshrl.u32 %v943, 7
    %v945 = vsub.s32 %v942, %v944
    %v946 = vrot.slane %v939, %v945
    %v947 = vcombine.high %v946, %v946
    %v949 = vunpack.c.l.s4 1966171168
    %v950 = vunpack.c.0.s8 %v949
    %v951 = vlaneseq
    %v952 = vshrl.u32 %v951, 7
    %v953 = vsub.s32 %v950, %v952
    %v954 = vrot.slane %v946, %v953
    %v956 = vunpack.c.l.s4 1966171168
    %v957 = vunpack.c.0.s8 %v956
    %v958 = vlaneseq
    %v959 = vshrl.u32 %v958, 7
    %v960 = vsub.s32 %v957, %v959
    %v961 = vrot.slane %v947, %v960
    %v962 = vcombine.high %v954, %v954
    %v963 = vcombine.high %v961, %v961
    %v964 = vlaneseq
    %v965 = vshrl.u32 %v964, 7
    %v966 = vsub.s32 0, %v965
    %v967 = vrot.slane %v954, %v966
    %v968 = vlaneseq
    %v969 = vshrl.u32 %v968, 7
    %v970 = vsub.s32 0, %v969
    %v971 = vrot.slane %v961, %v970
    %v972 = vlaneseq
    %v973 = vshrl.u32 %v972, 7
    %v974 = vsub.s32 0, %v973
    %v975 = vrot.slane %v962, %v974
    %v976 = vlaneseq
    %v977 = vshrl.u32 %v976, 7
    %v978 = vsub.s32 0, %v977
    %v979 = vrot.slane %v963, %v978
    %v984 = vmul.f32 %v967, %v767
    %v985 = vmul.f32 %v971, %v768
    %v986 = vmul.f32 %v975, %v769
    %v987 = vmul.f32 %v979, %v770
    %v988 = vsel %vm739, %v984, 0.0
    %v989 = vsel %vm739, %v985, 0.0
    %v990 = vadd.f32 %v988, %v989
    %v991 = vsel %vm739, %v986, 0.0
    %v992 = vadd.f32 %v990, %v991
    %v993 = vsel %vm739, %v987, 0.0
    %v994 = vadd.f32 %v992, %v993
    %v997 = vunpack.c.l.s4 1966171168
    %v998 = vunpack.c.0.s8 %v997
    %v999 = vlaneseq
    %v1000 = vshrl.u32 %v999, 7
    %v1001 = vsub.s32 %v998, %v1000
    %v1002 = vrot.slane %v263, %v1001
    %v1003 = vcombine.high %v1002, %v1002
    %v1005 = vunpack.c.l.s4 1966171168
    %v1006 = vunpack.c.0.s8 %v1005
    %v1007 = vlaneseq
    %v1008 = vshrl.u32 %v1007, 7
    %v1009 = vsub.s32 %v1006, %v1008
    %v1010 = vrot.slane %v1002, %v1009
    %v1012 = vunpack.c.l.s4 1966171168
    %v1013 = vunpack.c.0.s8 %v1012
    %v1014 = vlaneseq
    %v1015 = vshrl.u32 %v1014, 7
    %v1016 = vsub.s32 %v1013, %v1015
    %v1017 = vrot.slane %v1003, %v1016
    %v1018 = vcombine.high %v1010, %v1010
    %v1019 = vcombine.high %v1017, %v1017
    %v1020 = vlaneseq
    %v1021 = vshrl.u32 %v1020, 7
    %v1022 = vsub.s32 0, %v1021
    %v1023 = vrot.slane %v1010, %v1022
    %v1024 = vlaneseq
    %v1025 = vshrl.u32 %v1024, 7
    %v1026 = vsub.s32 0, %v1025
    %v1027 = vrot.slane %v1017, %v1026
    %v1028 = vlaneseq
    %v1029 = vshrl.u32 %v1028, 7
    %v1030 = vsub.s32 0, %v1029
    %v1031 = vrot.slane %v1018, %v1030
    %v1032 = vlaneseq
    %v1033 = vshrl.u32 %v1032, 7
    %v1034 = vsub.s32 0, %v1033
    %v1035 = vrot.slane %v1019, %v1034
    %v1040 = vmul.f32 %v1023, %v767
    %v1041 = vmul.f32 %v1027, %v768
    %v1042 = vmul.f32 %v1031, %v769
    %v1043 = vmul.f32 %v1035, %v770
    %v1044 = vsel %vm739, %v1040, 0.0
    %v1045 = vsel %vm739, %v1041, 0.0
    %v1046 = vadd.f32 %v1044, %v1045
    %v1047 = vsel %vm739, %v1042, 0.0
    %v1048 = vadd.f32 %v1046, %v1047
    %v1049 = vsel %vm739, %v1043, 0.0
    %v1050 = vadd.f32 %v1048, %v1049
    %v1051 = vcombine.high %v263, %v263
    %v1053 = vunpack.c.l.s4 1966171168
    %v1054 = vunpack.c.0.s8 %v1053
    %v1055 = vlaneseq
    %v1056 = vshrl.u32 %v1055, 7
    %v1057 = vsub.s32 %v1054, %v1056
    %v1058 = vrot.slane %v1051, %v1057
    %v1059 = vcombine.high %v1058, %v1058
    %v1061 = vunpack.c.l.s4 1966171168
    %v1062 = vunpack.c.0.s8 %v1061
    %v1063 = vlaneseq
    %v1064 = vshrl.u32 %v1063, 7
    %v1065 = vsub.s32 %v1062, %v1064
    %v1066 = vrot.slane %v1058, %v1065
    %v1068 = vunpack.c.l.s4 1966171168
    %v1069 = vunpack.c.0.s8 %v1068
    %v1070 = vlaneseq
    %v1071 = vshrl.u32 %v1070, 7
    %v1072 = vsub.s32 %v1069, %v1071
    %v1073 = vrot.slane %v1059, %v1072
    %v1074 = vcombine.high %v1066, %v1066
    %v1075 = vcombine.high %v1073, %v1073
    %v1076 = vlaneseq
    %v1077 = vshrl.u32 %v1076, 7
    %v1078 = vsub.s32 0, %v1077
    %v1079 = vrot.slane %v1066, %v1078
    %v1080 = vlaneseq
    %v1081 = vshrl.u32 %v1080, 7
    %v1082 = vsub.s32 0, %v1081
    %v1083 = vrot.slane %v1073, %v1082
    %v1084 = vlaneseq
    %v1085 = vshrl.u32 %v1084, 7
    %v1086 = vsub.s32 0, %v1085
    %v1087 = vrot.slane %v1074, %v1086
    %v1088 = vlaneseq
    %v1089 = vshrl.u32 %v1088, 7
    %v1090 = vsub.s32 0, %v1089
    %v1091 = vrot.slane %v1075, %v1090
    %v1096 = vmul.f32 %v1079, %v767
    %v1097 = vmul.f32 %v1083, %v768
    %v1098 = vmul.f32 %v1087, %v769
    %v1099 = vmul.f32 %v1091, %v770
    %v1100 = vsel %vm739, %v1096, 0.0
    %v1101 = vsel %vm739, %v1097, 0.0
    %v1102 = vadd.f32 %v1100, %v1101
    %v1103 = vsel %vm739, %v1098, 0.0
    %v1104 = vadd.f32 %v1102, %v1103
    %v1105 = vsel %vm739, %v1099, 0.0
    %v1106 = vadd.f32 %v1104, %v1105
    %v1109 = vunpack.c.l.s4 1966171168
    %v1110 = vunpack.c.0.s8 %v1109
    %v1111 = vlaneseq
    %v1112 = vshrl.u32 %v1111, 7
    %v1113 = vsub.s32 %v1110, %v1112
    %v1114 = vrot.slane %v268, %v1113
    %v1115 = vcombine.high %v1114, %v1114
    %v1117 = vunpack.c.l.s4 1966171168
    %v1118 = vunpack.c.0.s8 %v1117
    %v1119 = vlaneseq
    %v1120 = vshrl.u32 %v1119, 7
    %v1121 = vsub.s32 %v1118, %v1120
    %v1122 = vrot.slane %v1114, %v1121
    %v1124 = vunpack.c.l.s4 1966171168
    %v1125 = vunpack.c.0.s8 %v1124
    %v1126 = vlaneseq
    %v1127 = vshrl.u32 %v1126, 7
    %v1128 = vsub.s32 %v1125, %v1127
    %v1129 = vrot.slane %v1115, %v1128
    %v1130 = vcombine.high %v1122, %v1122
    %v1131 = vcombine.high %v1129, %v1129
    %v1132 = vlaneseq
    %v1133 = vshrl.u32 %v1132, 7
    %v1134 = vsub.s32 0, %v1133
    %v1135 = vrot.slane %v1122, %v1134
    %v1136 = vlaneseq
    %v1137 = vshrl.u32 %v1136, 7
    %v1138 = vsub.s32 0, %v1137
    %v1139 = vrot.slane %v1129, %v1138
    %v1140 = vlaneseq
    %v1141 = vshrl.u32 %v1140, 7
    %v1142 = vsub.s32 0, %v1141
    %v1143 = vrot.slane %v1130, %v1142
    %v1144 = vlaneseq
    %v1145 = vshrl.u32 %v1144, 7
    %v1146 = vsub.s32 0, %v1145
    %v1147 = vrot.slane %v1131, %v1146
    %v1152 = vmul.f32 %v1135, %v767
    %v1153 = vmul.f32 %v1139, %v768
    %v1154 = vmul.f32 %v1143, %v769
    %v1155 = vmul.f32 %v1147, %v770
    %v1156 = vsel %vm739, %v1152, 0.0
    %v1157 = vsel %vm739, %v1153, 0.0
    %v1158 = vadd.f32 %v1156, %v1157
    %v1159 = vsel %vm739, %v1154, 0.0
    %v1160 = vadd.f32 %v1158, %v1159
    %v1161 = vsel %vm739, %v1155, 0.0
    %v1162 = vadd.f32 %v1160, %v1161
    %v1163 = vcombine.high %v268, %v268
    %v1165 = vunpack.c.l.s4 1966171168
    %v1166 = vunpack.c.0.s8 %v1165
    %v1167 = vlaneseq
    %v1168 = vshrl.u32 %v1167, 7
    %v1169 = vsub.s32 %v1166, %v1168
    %v1170 = vrot.slane %v1163, %v1169
    %v1171 = vcombine.high %v1170, %v1170
    %v1173 = vunpack.c.l.s4 1966171168
    %v1174 = vunpack.c.0.s8 %v1173
    %v1175 = vlaneseq
    %v1176 = vshrl.u32 %v1175, 7
    %v1177 = vsub.s32 %v1174, %v1176
    %v1178 = vrot.slane %v1170, %v1177
    %v1180 = vunpack.c.l.s4 1966171168
    %v1181 = vunpack.c.0.s8 %v1180
    %v1182 = vlaneseq
    %v1183 = vshrl.u32 %v1182, 7
    %v1184 = vsub.s32 %v1181, %v1183
    %v1185 = vrot.slane %v1171, %v1184
    %v1186 = vcombine.high %v1178, %v1178
    %v1187 = vcombine.high %v1185, %v1185
    %v1188 = vlaneseq
    %v1189 = vshrl.u32 %v1188, 7
    %v1190 = vsub.s32 0, %v1189
    %v1191 = vrot.slane %v1178, %v1190
    %v1192 = vlaneseq
    %v1193 = vshrl.u32 %v1192, 7
    %v1194 = vsub.s32 0, %v1193
    %v1195 = vrot.slane %v1185, %v1194
    %v1196 = vlaneseq
    %v1197 = vshrl.u32 %v1196, 7
    %v1198 = vsub.s32 0, %v1197
    %v1199 = vrot.slane %v1186, %v1198
    %v1200 = vlaneseq
    %v1201 = vshrl.u32 %v1200, 7
    %v1202 = vsub.s32 0, %v1201
    %v1203 = vrot.slane %v1187, %v1202
    %v1208 = vmul.f32 %v1191, %v767
    %v1209 = vmul.f32 %v1195, %v768
    %v1210 = vmul.f32 %v1199, %v769
    %v1211 = vmul.f32 %v1203, %v770
    %v1212 = vsel %vm739, %v1208, 0.0
    %v1213 = vsel %vm739, %v1209, 0.0
    %v1214 = vadd.f32 %v1212, %v1213
    %v1215 = vsel %vm739, %v1210, 0.0
    %v1216 = vadd.f32 %v1214, %v1215
    %v1217 = vsel %vm739, %v1211, 0.0
    %v1218 = vadd.f32 %v1216, %v1217
    %v1220 = vrot.slane %v882, 4
    %v1223 = vrot.slane %v994, 4
    %v1226 = vrot.slane %v1106, 4
    %v1229 = vrot.slane %v1218, 4
    %v1231 = vsel %vm739, %v826, %v1220
    %v1232 = vsel %vm739, %v938, %v1223
    %v1233 = vsel %vm739, %v1050, %v1226
    %v1234 = vsel %vm739, %v1162, %v1229
    %v1235 = vld [vmem:[%s3] sm:$0xf]
    %v1236 = vld [vmem:[%s4] sm:$0xf]
    %1238 = vset.pattern.permute.xlu0 0
    %1239 = vperm.xlu0 %1238, %v1236
    %v1240 = vpop.permute.xlu0 %1239
    %v1243 = vsel %vm109, %v1235, 0
    %1245 = vmatprep.subr.mxu0 0.0
    %1246 = vmatpush1.msra.mxu0 %v1231
    %1247 = vmatprep.subr.mxu0 0.0
    %1248 = vmatpush1.msra.mxu0 %v1232
    %1249 = vmatprep.subr.mxu0 0.0
    %1250 = vmatpush1.msra.mxu0 %v1233
    %1251 = vmatprep.subr.mxu0 0.0
    %1252 = vmatpush1.msra.mxu0 %v1234
    %1253 = vmatprep.subr.mxu0 0.0
    %1254 = vmatpush1.msra.mxu0 0.0
    %1255 = vmatprep.subr.mxu0 0.0
    %1256 = vmatpush1.msra.mxu0 0.0
    %1257 = vmatprep.subr.mxu0 0.0
    %1258 = vmatpush1.msra.mxu0 0.0
    %1259 = vmatprep.subr.mxu0 0.0
    %1260 = vmatpush1.msra.mxu0 0.0
    %1261 = vmatprep.subr.mxu0 0.0
    %1262 = vmatpush1.msra.mxu0 0.0
    %1263 = vmatprep.subr.mxu0 0.0
    %1264 = vmatpush1.msra.mxu0 0.0
    %1265 = vmatprep.subr.mxu0 0.0
    %1266 = vmatpush1.msra.mxu0 0.0
    %1267 = vmatprep.subr.mxu0 0.0
    %1268 = vmatpush1.msra.mxu0 0.0
    %1269 = vmatprep.subr.mxu0 0.0
    %1270 = vmatpush1.msra.mxu0 0.0
    %1271 = vmatprep.subr.mxu0 0.0
    %1272 = vmatpush1.msra.mxu0 0.0
    %1273 = vmatprep.subr.mxu0 0.0
    %1274 = vmatpush1.msra.mxu0 0.0
    %1275 = vmatprep.subr.mxu0 0.0
    %1276 = vmatpush1.msra.mxu0 0.0
    %1277 = vmatprep.subr.mxu0 0.0
    %1278 = vmatpush1.msra.mxu0 0.0
    %1279 = vmatprep.subr.mxu0 0.0
    %1280 = vmatpush1.msra.mxu0 0.0
    %1281 = vmatprep.subr.mxu0 0.0
    %1282 = vmatpush1.msra.mxu0 0.0
    %1283 = vmatprep.subr.mxu0 0.0
    %1284 = vmatpush1.msra.mxu0 0.0
    %1285 = vmatprep.subr.mxu0 0.0
    %1286 = vmatpush1.msra.mxu0 0.0
    %1287 = vmatprep.subr.mxu0 0.0
    %1288 = vmatpush1.msra.mxu0 0.0
    %1289 = vmatprep.subr.mxu0 0.0
    %1290 = vmatpush1.msra.mxu0 0.0
    %1291 = vmatprep.subr.mxu0 0.0
    %1292 = vmatpush1.msra.mxu0 0.0
    %1293 = vmatprep.subr.mxu0 0.0
    %1294 = vmatpush1.msra.mxu0 0.0
    %1295 = vmatprep.subr.mxu0 0.0
    %1296 = vmatpush1.msra.mxu0 0.0
    %1297 = vmatprep.subr.mxu0 0.0
    %1298 = vmatpush1.msra.mxu0 0.0
    %1299 = vmatprep.subr.mxu0 0.0
    %1300 = vmatpush1.msra.mxu0 0.0
    %1301 = vmatprep.subr.mxu0 0.0
    %1302 = vmatpush1.msra.mxu0 0.0
    %1303 = vmatprep.subr.mxu0 0.0
    %1304 = vmatpush1.msra.mxu0 0.0
    %1305 = vmatprep.subr.mxu0 0.0
    %1306 = vmatpush1.msra.mxu0 0.0
    %1307 = vmatprep.subr.mxu0 0.0
    %1308 = vmatpush1.msra.mxu0 0.0
    %1309 = vmatprep.mubr.f32.mxu0 0.0
    %1310 = vmatmul.mubr.f32.gmra.mrb[0].mxu0 %v1243
    %v1311 = vpop.f32.mrb[0].mxu0
    %v1312 = vadd.f32 %v1240, %v1311
    %v1313 = vpop.f32.mrb[0].mxu0
    %1314 = vdwg.mxu0
    %1315 = vst [vmem:[#allocation2] sm:$0xf] %v1312
    // Predicated region
    $region22: #{tpu_custom_call.1} parent=1 // pred_check
      _
    $region23: #{tpu_custom_call.1} parent=1 // pred_check_branch
      %1317 = sbr.rel (0) target = $region25
    $region24: #{tpu_custom_call.1} parent=1 // pred_region
      %s1319 = ssub.s32 64, 64
      %1320 = vsyncadd [#allocation3], %s1319
      %s1322 = sshll.u32 [#allocation2], 4
      %s1323 = int_to_ptr.vmem [resolvable:$true] %s1322
      %1325 = dma.vmem_to_hbm [thread:$0]  %s1323, 64, %s5, [#allocation3]
    $region25: #{tpu_custom_call.1} parent=1 // pred_fallthru
      _
    // Predicated region
    $region26: #{tpu_custom_call.1} parent=1 // pred_check
      _
    $region27: #{tpu_custom_call.1} parent=1 // pred_check_branch
      %1327 = sbr.rel (0) target = $region29
    $region28: #{tpu_custom_call.1} parent=1 // pred_region
      %1328 = dma.done [#allocation3], 64
    $region29: #{tpu_custom_call.1} parent=1 // pred_fallthru
      _
    %1329 = vsyncpa [#allocation3], 1

</llo_original>
